<compile_context>
chip_gen: v7x
topology: tpu7x:2x2x1
jax: 0.10.0
libtpu: 0.0.40
codegen_flags: <defaults>
</compile_context>

<pallas_src>
import jax
import jax.numpy as jnp
from jax.experimental import pallas as pl
from jax.experimental.pallas import tpu as pltpu

BN_EPS = 1e-5
LANE = 128                       # lane width: pad Cout / K to multiples of this
DEFAULT_TILE_M = 256             # rows per M tile (multiple of 8)
VMEM_LIMIT = 32 * 1024 * 1024    # explicit scoped-VMEM budget (safe on v5e/v6e/v7x)


def _round_up(x, m):
    return (x + m - 1) // m * m


# ---------------------------------------------------------------------------
# Pallas kernel 1: tiled matmul (conv) + per-tile BN partial statistics
#   grid = (M tiles, Cout tiles, K tiles)   ("parallel", "parallel", "arbitrary")
# ---------------------------------------------------------------------------
def _matmul_stats_kernel(p_ref, w_ref, y_ref, stats_ref, acc_ref):
    k = pl.program_id(2)

    @pl.when(k == 0)
    def _():
        acc_ref[...] = jnp.zeros_like(acc_ref)

    acc_ref[...] += jnp.dot(p_ref[...], w_ref[...],
                            preferred_element_type=jnp.float32)

    @pl.when(k == pl.num_programs(2) - 1)
    def _():
        acc = acc_ref[...]
        y_ref[...] = acc.astype(y_ref.dtype)
        # per-channel partial sums for this M tile (row 0 = sum, row 1 = sum^2)
        sums = jnp.sum(acc, axis=0, keepdims=True)
        sqs = jnp.sum(acc * acc, axis=0, keepdims=True)
        rows = jax.lax.broadcasted_iota(jnp.int32, stats_ref.shape, 0)
        stats_ref[...] = (jnp.where(rows == 0, sums, 0.0)
                          + jnp.where(rows == 1, sqs, 0.0))


def _conv_stats_call(p_pad, w_pad, *, tile_m, tile_n, tile_k):
    m_pad, k_pad = p_pad.shape
    cout_pad = w_pad.shape[1]
    gm, gn, gk = m_pad // tile_m, cout_pad // tile_n, k_pad // tile_k

    return pl.pallas_call(
        _matmul_stats_kernel,
        out_shape=(
            jax.ShapeDtypeStruct((m_pad, cout_pad), jnp.float32),
            jax.ShapeDtypeStruct((gm * 8, cout_pad), jnp.float32),
        ),
        grid=(gm, gn, gk),
        in_specs=[
            pl.BlockSpec((tile_m, tile_k), lambda i, j, k: (i, k)),
            pl.BlockSpec((tile_k, tile_n), lambda i, j, k: (k, j)),
        ],
        out_specs=(
            pl.BlockSpec((tile_m, tile_n), lambda i, j, k: (i, j)),
            pl.BlockSpec((8, tile_n), lambda i, j, k: (i, j)),
        ),
        scratch_shapes=[pltpu.VMEM((tile_m, tile_n), jnp.float32)],
        compiler_params=pltpu.CompilerParams(
            dimension_semantics=("parallel", "parallel", "arbitrary"),
            vmem_limit_bytes=VMEM_LIMIT),
    )(p_pad, w_pad)


# ---------------------------------------------------------------------------
# Pallas kernel 2: tiled BN-apply (+ optional fused residual BN-apply) + ReLU
#   grid = (M tiles, Cout tiles)   ("parallel", "parallel")
# ---------------------------------------------------------------------------
def _bn_apply_call(y_pad, scale, shift, residual=None, rscale=None, rshift=None,
                   *, relu, out_dtype, tile_m, tile_n=LANE):
    m_pad, cout_pad = y_pad.shape
    gm, gn = m_pad // tile_m, cout_pad // tile_n
    has_res = residual is not None

    def kernel(y_ref, sc_ref, sh_ref, *rest):
        if has_res:
            r_ref, rsc_ref, rsh_ref, o_ref = rest
        else:
            (o_ref,) = rest
        out = y_ref[...] * sc_ref[...] + sh_ref[...]
        if has_res:
            out = out + (r_ref[...] * rsc_ref[...] + rsh_ref[...])
        if relu:
            out = jnp.maximum(out, 0.0)
        o_ref[...] = out.astype(o_ref.dtype)

    in_specs = [
        pl.BlockSpec((tile_m, tile_n), lambda i, j: (i, j)),
        pl.BlockSpec((1, tile_n), lambda i, j: (0, j)),
        pl.BlockSpec((1, tile_n), lambda i, j: (0, j)),
    ]
    args = [y_pad, scale, shift]
    if has_res:
        in_specs += [
            pl.BlockSpec((tile_m, tile_n), lambda i, j: (i, j)),
            pl.BlockSpec((1, tile_n), lambda i, j: (0, j)),
            pl.BlockSpec((1, tile_n), lambda i, j: (0, j)),
        ]
        args += [residual, rscale, rshift]

    return pl.pallas_call(
        kernel,
        out_shape=jax.ShapeDtypeStruct((m_pad, cout_pad), out_dtype),
        grid=(gm, gn),
        in_specs=in_specs,
        out_specs=pl.BlockSpec((tile_m, tile_n), lambda i, j: (i, j)),
        compiler_params=pltpu.CompilerParams(
            dimension_semantics=("parallel", "parallel"),
            vmem_limit_bytes=VMEM_LIMIT),
    )(*args)


# ---------------------------------------------------------------------------
# Glue: im2col (bf16) / weight reshaping (plain JAX)
# ---------------------------------------------------------------------------
def _im2col_3x3(x_nhwc, stride):
    """3x3, padding=1 patches in bf16.  Returns (N*Ho*Wo, 9*C), Ho, Wo."""
    N, H, W, C = x_nhwc.shape
    xp = jnp.pad(x_nhwc, ((0, 0), (1, 1), (1, 1), (0, 0)))
    Ho = (H + 2 - 3) // stride + 1
    Wo = (W + 2 - 3) // stride + 1
    cols = []
    for dh in range(3):
        for dw in range(3):
            cols.append(
                xp[:, dh:dh + (Ho - 1) * stride + 1:stride,
                      dw:dw + (Wo - 1) * stride + 1:stride, :])
    p = jnp.stack(cols, axis=3)                # (N, Ho, Wo, 9, C), 9 = kh*3+kw
    return p.reshape(N * Ho * Wo, 9 * C).astype(jnp.bfloat16), Ho, Wo


def _w3x3_to_2d(w_oihw):
    cout, cin = w_oihw.shape[0], w_oihw.shape[1]
    return jnp.transpose(w_oihw, (2, 3, 1, 0)).reshape(9 * cin, cout)


def _w1x1_to_2d(w_oihw):
    cout, cin = w_oihw.shape[0], w_oihw.shape[1]
    return jnp.transpose(w_oihw, (2, 3, 1, 0)).reshape(cin, cout)


# ---------------------------------------------------------------------------
# conv + BN-statistics layer (pass 1) and stat finalization
# ---------------------------------------------------------------------------
def _conv_layer(patches_bf16, w2d, gamma, beta, *, m_true, m_pad, tile_m,
                tile_n=LANE, tile_k=LANE, eps=BN_EPS):
    K = patches_bf16.shape[1]
    cout = w2d.shape[1]
    k_pad = _round_up(K, tile_k)
    cout_pad = _round_up(cout, tile_n)

    p_pad = jnp.pad(patches_bf16,
                    ((0, m_pad - m_true), (0, k_pad - K))).astype(jnp.bfloat16)
    w_pad = jnp.pad(w2d, ((0, k_pad - K), (0, cout_pad - cout))).astype(jnp.bfloat16)

    y_pad, stats = _conv_stats_call(p_pad, w_pad,
                                    tile_m=tile_m, tile_n=tile_n, tile_k=tile_k)

    # Finalize global (batch) statistics from per-tile partial sums.
    gm = m_pad // tile_m
    st = stats.reshape(gm, 8, cout_pad)
    ch_sum = jnp.sum(st[:, 0, :], axis=0)
    ch_sq = jnp.sum(st[:, 1, :], axis=0)
    mean = ch_sum / m_true
    var = jnp.maximum(ch_sq / m_true - mean * mean, 0.0)
    inv = jax.lax.rsqrt(var + eps)

    g_pad = jnp.pad(gamma.astype(jnp.float32), (0, cout_pad - cout))
    b_pad = jnp.pad(beta.astype(jnp.float32), (0, cout_pad - cout))
    scale = (g_pad * inv).reshape(1, cout_pad)
    shift = (b_pad - mean * g_pad * inv).reshape(1, cout_pad)
    return y_pad, scale, shift, cout_pad


# ---------------------------------------------------------------------------
# BasicBlock forward (Pallas)
# ---------------------------------------------------------------------------
def basic_block_forward(x_nchw, params, stride, *, tile_m=DEFAULT_TILE_M):
    x = jnp.transpose(x_nchw, (0, 2, 3, 1)).astype(jnp.float32)   # NCHW -> NHWC
    N, H, W, cin = x.shape
    planes = params["w1"].shape[0]
    x_bf = x.astype(jnp.bfloat16)

    # conv1 (3x3, stride) + bn1 stats
    p1, Ho, Wo = _im2col_3x3(x_bf, stride)
    M = N * Ho * Wo
    tm = min(tile_m, _round_up(M, 8))
    m_pad = _round_up(M, tm)

    y1, s1, t1, _ = _conv_layer(p1, _w3x3_to_2d(params["w1"]),
                                params["g1"], params["b1"],
                                m_true=M, m_pad=m_pad, tile_m=tm)
    # bn1 apply + ReLU, emitted in bf16 (directly feeds conv2's matmul)
    a1 = _bn_apply_call(y1, s1, t1, relu=True, out_dtype=jnp.bfloat16, tile_m=tm)
    a1_img = a1[:M, :planes].reshape(N, Ho, Wo, planes)

    # conv2 (3x3, stride 1) + bn2 stats
    p2, _, _ = _im2col_3x3(a1_img, 1)
    y2, s2, t2, cpad = _conv_layer(p2, _w3x3_to_2d(params["w2"]),
                                   params["g2"], params["b2"],
                                   m_true=M, m_pad=m_pad, tile_m=tm)

    # shortcut (residual fed to the final apply kernel as raw value + its own
    # folded BN scale/shift, so no extra full-size HBM pass is needed)
    if stride != 1 or cin != planes:
        xs = x_bf[:, ::stride, ::stride, :].reshape(M, cin)
        ysc, ssc, tsc, _ = _conv_layer(xs, _w1x1_to_2d(params["ws"]),
                                       params["gs"], params["bs"],
                                       m_true=M, m_pad=m_pad, tile_m=tm)
        res, rsc, rsh = ysc, ssc, tsc
    else:
        res = jnp.pad(x.reshape(M, cin), ((0, m_pad - M), (0, cpad - cin)))
        rsc = jnp.ones((1, cpad), jnp.float32)
        rsh = jnp.zeros((1, cpad), jnp.float32)

    # bn2 apply + residual + ReLU
    out = _bn_apply_call(y2, s2, t2, res, rsc, rsh,
                         relu=True, out_dtype=jnp.float32, tile_m=tm)
    out = out[:M, :planes].reshape(N, Ho, Wo, planes)
    return jnp.transpose(out, (0, 3, 1, 2))                        # NHWC -> NCHW


# ---------------------------------------------------------------------------
# Pure-JAX reference (bf16 conv operands, f32 accumulation — same numerics)
# ---------------------------------------------------------------------------
def _ref_conv(x_nhwc, w_oihw, stride, padding):
    return jax.lax.conv_general_dilated(
        x_nhwc.astype(jnp.bfloat16),
        jnp.transpose(w_oihw, (2, 3, 1, 0)).astype(jnp.bfloat16),
        (stride, stride), padding,
        dimension_numbers=("NHWC", "HWIO", "NHWC"),
        preferred_element_type=jnp.float32)


def _ref_bn(y, g, b, eps=BN_EPS):
    mean = jnp.mean(y, axis=(0, 1, 2), keepdims=True)
    var = jnp.mean(jnp.square(y - mean), axis=(0, 1, 2), keepdims=True)
    return (y - mean) * jax.lax.rsqrt(var + eps) * g + b


def ref_basic_block(x_nchw, params, stride):
    x = jnp.transpose(x_nchw, (0, 2, 3, 1)).astype(jnp.float32)
    planes = params["w1"].shape[0]
    cin = x.shape[-1]
    out = jax.nn.relu(_ref_bn(_ref_conv(x, params["w1"], stride, [(1, 1), (1, 1)]),
                              params["g1"], params["b1"]))
    out = _ref_bn(_ref_conv(out, params["w2"], 1, [(1, 1), (1, 1)]),
                  params["g2"], params["b2"])
    if stride != 1 or cin != planes:
        sc = _ref_bn(_ref_conv(x, params["ws"], stride, [(0, 0), (0, 0)]),
                     params["gs"], params["bs"])
    else:
        sc = x
    return jnp.transpose(jax.nn.relu(out + sc), (0, 3, 1, 2))


# ---------------------------------------------------------------------------
# Deterministic parameter init (shapes from BasicBlock.__init__)
# ---------------------------------------------------------------------------
def init_params(key, in_planes, planes, stride):
    ks = jax.random.split(key, 9)
    p = {
        "w1": 0.1 * jax.random.normal(ks[0], (planes, in_planes, 3, 3), jnp.float32),
        "g1": 1.0 + 0.1 * jax.random.normal(ks[1], (planes,), jnp.float32),
        "b1": 0.1 * jax.random.normal(ks[2], (planes,), jnp.float32),
        "w2": 0.1 * jax.random.normal(ks[3], (planes, planes, 3, 3), jnp.float32),
        "g2": 1.0 + 0.1 * jax.random.normal(ks[4], (planes,), jnp.float32),
        "b2": 0.1 * jax.random.normal(ks[5], (planes,), jnp.float32),
    }
    if stride != 1 or in_planes != planes:
        p["ws"] = 0.1 * jax.random.normal(ks[6], (planes, in_planes, 1, 1), jnp.float32)
        p["gs"] = 1.0 + 0.1 * jax.random.normal(ks[7], (planes,), jnp.float32)
        p["bs"] = 0.1 * jax.random.normal(ks[8], (planes,), jnp.float32)
    return p


if __name__ == "__main__":
    key = jax.random.PRNGKey(0)
    kx, kp1, kp2 = jax.random.split(key, 3)

    x = jax.random.normal(kx, (2, 4, 16, 16), jnp.float32)

    # Case 1: identity shortcut (in_planes == planes, stride 1)
    params1 = init_params(kp1, in_planes=4, planes=4, stride=1)
    out1 = jax.block_until_ready(basic_block_forward(x, params1, stride=1))
    ref1 = ref_basic_block(x, params1, stride=1)
    assert out1.shape == (2, 4, 16, 16)
    assert jnp.allclose(out1, ref1, rtol=1e-2, atol=1e-2), "identity-shortcut mismatch"

    # Case 2: projection shortcut (in_planes != planes, stride 2)
    params2 = init_params(kp2, in_planes=4, planes=8, stride=2)
    out2 = jax.block_until_ready(basic_block_forward(x, params2, stride=2))
    ref2 = ref_basic_block(x, params2, stride=2)
    assert out2.shape == (2, 8, 8, 8)
    assert jnp.allclose(out2, ref2, rtol=1e-2, atol=1e-2), "projection-shortcut mismatch"

    print("KERNEL_OK")
</pallas_src>

<mosaic_0001>
module attributes {stable_mosaic.version = 11 : i64} {
  func.func @_matmul_stats_kernel(%arg0: i32, %arg1: i32, %arg2: i32, %arg3: memref<256x128xbf16, #tpu.memory_space<vmem>>, %arg4: memref<128x128xbf16, #tpu.memory_space<vmem>>, %arg5: memref<256x128xf32, #tpu.memory_space<vmem>>, %arg6: memref<8x128xf32, #tpu.memory_space<vmem>>, %arg7: memref<256x128xf32, #tpu.memory_space<vmem>>) attributes {dimension_semantics = [#tpu.dimension_semantics<parallel>, #tpu.dimension_semantics<parallel>, #tpu.dimension_semantics<arbitrary>], iteration_bounds = array<i64: 2, 1, 1>, scalar_prefetch = 0 : i64, scratch_operands = 1 : i64, tpu.core_type = #tpu.core_type<tc>, window_params = [{transform_indices = @transform_0, window_bounds = array<i64: 256, 128>}, {transform_indices = @transform_1, window_bounds = array<i64: 128, 128>}, {transform_indices = @transform_2, window_bounds = array<i64: 256, 128>}, {transform_indices = @transform_3, window_bounds = array<i64: 8, 128>}]} {
    %c0_i32 = arith.constant 0 : i32
    %0 = arith.cmpi eq, %arg2, %c0_i32 : i32
    %1 = arith.extui %0 : i1 to i32
    %c0_i32_0 = arith.constant 0 : i32
    %2 = arith.cmpi ne, %1, %c0_i32_0 : i32
    scf.if %2 {
      %cst_10 = arith.constant 0.000000e+00 : f32
      %12 = vector.broadcast %cst_10 : f32 to vector<256x128xf32>
      %c0_11 = arith.constant 0 : index
      %c0_12 = arith.constant 0 : index
      %13 = vector.load %arg7[%c0_11, %c0_12] : memref<256x128xf32, #tpu.memory_space<vmem>>, vector<256x128xf32>
      tpu.vector_store %arg7[%c0_11, %c0_12], %12 {strides = array<i32>} : memref<256x128xf32, #tpu.memory_space<vmem>>, vector<256x128xf32>,
    } else {
    }
    %c0 = arith.constant 0 : index
    %c0_1 = arith.constant 0 : index
    %3 = vector.load %arg7[%c0, %c0_1] : memref<256x128xf32, #tpu.memory_space<vmem>>, vector<256x128xf32>
    %c0_2 = arith.constant 0 : index
    %c0_3 = arith.constant 0 : index
    %4 = vector.load %arg3[%c0_2, %c0_3] : memref<256x128xbf16, #tpu.memory_space<vmem>>, vector<256x128xbf16>
    %c0_4 = arith.constant 0 : index
    %c0_5 = arith.constant 0 : index
    %5 = vector.load %arg4[%c0_4, %c0_5] : memref<128x128xbf16, #tpu.memory_space<vmem>>, vector<128x128xbf16>
    %cst = arith.constant dense<0.000000e+00> : vector<256x128xf32>
    %6 = tpu.matmul %4, %5, %cst {dimension_numbers = #tpu.dot_dimension_numbers<[1], [0], [0], [1], [0, 0, 1, 1], [], []>} : vector<256x128xbf16>, vector<128x128xbf16>, vector<256x128xf32> -> vector<256x128xf32>
    %7 = arith.addf %3, %6 : vector<256x128xf32>
    %c0_6 = arith.constant 0 : index
    %c0_7 = arith.constant 0 : index
    %8 = vector.load %arg7[%c0_6, %c0_7] : memref<256x128xf32, #tpu.memory_space<vmem>>, vector<256x128xf32>
    tpu.vector_store %arg7[%c0_6, %c0_7], %7 {strides = array<i32>} : memref<256x128xf32, #tpu.memory_space<vmem>>, vector<256x128xf32>,
    %c0_i32_8 = arith.constant 0 : i32
    %9 = arith.cmpi eq, %arg2, %c0_i32_8 : i32
    %10 = arith.extui %9 : i1 to i32
    %c0_i32_9 = arith.constant 0 : i32
    %11 = arith.cmpi ne, %10, %c0_i32_9 : i32
    scf.if %11 {
      %c0_10 = arith.constant 0 : index
      %c0_11 = arith.constant 0 : index
      %12 = vector.load %arg7[%c0_10, %c0_11] : memref<256x128xf32, #tpu.memory_space<vmem>>, vector<256x128xf32>
      %c0_12 = arith.constant 0 : index
      %c0_13 = arith.constant 0 : index
      %13 = vector.load %arg5[%c0_12, %c0_13] : memref<256x128xf32, #tpu.memory_space<vmem>>, vector<256x128xf32>
      tpu.vector_store %arg5[%c0_12, %c0_13], %12 {strides = array<i32>} : memref<256x128xf32, #tpu.memory_space<vmem>>, vector<256x128xf32>,
      %cst_14 = arith.constant dense<0.000000e+00> : vector<128xf32>
      %14 = vector.multi_reduction <add>, %12, %cst_14 [0] : vector<256x128xf32> to vector<128xf32>
      %15 = vector.shape_cast %14 : vector<128xf32> to vector<1x128xf32>
      %16 = arith.mulf %12, %12 : vector<256x128xf32>
      %cst_15 = arith.constant dense<0.000000e+00> : vector<128xf32>
      %17 = vector.multi_reduction <add>, %16, %cst_15 [0] : vector<256x128xf32> to vector<128xf32>
      %18 = vector.shape_cast %17 : vector<128xf32> to vector<1x128xf32>
      %19 = tpu.iota {dimensions = array<i32: 0>} : vector<8x128xi32>
      %c0_i32_16 = arith.constant 0 : i32
      %20 = vector.broadcast %c0_i32_16 : i32 to vector<8x128xi32>
      %21 = arith.cmpi eq, %19, %20 : vector<8x128xi32>
      %cst_17 = arith.constant 0.000000e+00 : f32
      %22 = vector.shape_cast %15 : vector<1x128xf32> to vector<1x128xf32>
      %23 = vector.broadcast %22 : vector<1x128xf32> to vector<8x128xf32>
      %24 = vector.broadcast %cst_17 : f32 to vector<8x128xf32>
      %25 = arith.select %21, %23, %24 : vector<8x128xi1>, vector<8x128xf32>
      %c1_i32 = arith.constant 1 : i32
      %26 = vector.broadcast %c1_i32 : i32 to vector<8x128xi32>
      %27 = arith.cmpi eq, %19, %26 : vector<8x128xi32>
      %cst_18 = arith.constant 0.000000e+00 : f32
      %28 = vector.shape_cast %18 : vector<1x128xf32> to vector<1x128xf32>
      %29 = vector.broadcast %28 : vector<1x128xf32> to vector<8x128xf32>
      %30 = vector.broadcast %cst_18 : f32 to vector<8x128xf32>
      %31 = arith.select %27, %29, %30 : vector<8x128xi1>, vector<8x128xf32>
      %32 = arith.addf %25, %31 : vector<8x128xf32>
      %c0_19 = arith.constant 0 : index
      %c0_20 = arith.constant 0 : index
      %33 = vector.load %arg6[%c0_19, %c0_20] : memref<8x128xf32, #tpu.memory_space<vmem>>, vector<8x128xf32>
      tpu.vector_store %arg6[%c0_19, %c0_20], %32 {strides = array<i32>} : memref<8x128xf32, #tpu.memory_space<vmem>>, vector<8x128xf32>,
    } else {
    }
    return
  }
  func.func @transform_0(%arg0: i32, %arg1: i32, %arg2: i32) -> (i32, i32) {
    %c0_i32 = arith.constant 0 : i32
    return %arg0, %arg2 : i32, i32
  }
  func.func @transform_1(%arg0: i32, %arg1: i32, %arg2: i32) -> (i32, i32) {
    %c0_i32 = arith.constant 0 : i32
    return %arg2, %arg1 : i32, i32
  }
  func.func @transform_2(%arg0: i32, %arg1: i32, %arg2: i32) -> (i32, i32) {
    %c0_i32 = arith.constant 0 : i32
    return %arg0, %arg1 : i32, i32
  }
  func.func @transform_3(%arg0: i32, %arg1: i32, %arg2: i32) -> (i32, i32) {
    %c0_i32 = arith.constant 0 : i32
    return %arg0, %arg1 : i32, i32
  }
}

</mosaic_0001>

<llo_original>
// kernel: tpu_custom_call.1
$region0: #{tpu_custom_call.1}
  #allocation0 [shape = 'u32[]', space=smem, size = 0x4, offset = 0x4, fixed_abs, tag = 'smem constant byte address 0x4 - core index']
  #allocation1 [shape = 'u32[144,128]{1,0:T(1,128)}', space=vmem, size = 0x12000, scoped, tag = 'internal scratch']
  #allocation2 [shape = 'f32[256,128]{1,0:T(8,128)}', space=vmem, size = 0x20000, scoped, tag = 'scratch operand']
  %s0 = inlined_call_operand.hbm [shape: bf16[512,128], index: 0, kind: input, shape index: {}]
  %s1 = inlined_call_operand.hbm [shape: bf16[128,128], index: 1, kind: input, shape index: {}]
  %s2 = inlined_call_operand.hbm [shape: f32[512,128], index: 2, kind: output, shape index: {0}]
  %s3 = inlined_call_operand.hbm [shape: f32[16,128], index: 3, kind: output, shape index: {1}]
  %4 = xla_tuple %s2, %s3
  %s5 = sld [smem:[#allocation0]]
  $region65: #{tpu_custom_call.1} parent=0
    _
  %s7 = ssub.s32 1, %s5
  %s8 = scalar_select 0, %s7, %s5
  $region1: #{tpu_custom_call.1} parent=0
    #allocation3 [shape = 'u8[131072]{0}', space=vmem, size = 0x20000, scoped, tag = 'input window, operand 0']
    #allocation4 [shape = 's32[2]{0}', space=sflag, size = 0x8, scoped, tag = 'scoped memory for tpu_custom_call.1']
    #allocation5 [shape = 's32[2]{0}', space=sflag, size = 0x8, scoped, tag = 'scoped memory for tpu_custom_call.1']
    #allocation6 [shape = 'u8[32768]{0}', space=vmem, size = 0x8000, scoped, tag = 'input window, operand 1, single buffered']
    #allocation7 [shape = 's32[1]{0}', space=sflag, size = 0x4, scoped, tag = 'scoped memory for tpu_custom_call.1']
    #allocation8 [shape = 'u8[262144]{0}', space=vmem, size = 0x40000, scoped, tag = 'output window, operand 0']
    #allocation9 [shape = 'u8[8192]{0}', space=vmem, size = 0x2000, scoped, tag = 'output window, operand 1']
    #allocation10 [shape = 's32[2]{0}', space=sflag, size = 0x8, scoped, tag = 'scoped memory for tpu_custom_call.1']
    %9 = vsyncpa [#allocation4], 0
    %s10 = scalar_lea.sflag [#allocation4], 1
    %11 = vsyncpa %s10, 0
    %12 = vsyncpa [#allocation7], 0
    %13 = vsyncpa [#allocation5], 0
    %s14 = scalar_lea.sflag [#allocation5], 1
    %15 = vsyncpa %s14, 0
    %16 = vsyncpa [#allocation10], 0
    %s17 = scalar_lea.sflag [#allocation10], 1
    %18 = vsyncpa %s17, 0
    loop: start=0, step=1, limit=4
    $region2: #{tpu_custom_call.1} parent=1 // loop_pre_header
      _
    $region3: #{tpu_custom_call.1} parent=1 // loop_header
      %s20 = sphi 0, %s24
      %p21 = scmp.ge.s32.totalorder %s20, 4
      %s27 = sphi 0, %s46
      %s28 = sphi 0, %s42
      %s29 = sphi 0, %s38
      %s30 = sphi 0, %s27
      %s31 = sphi 0, %s28
      %s32 = sphi 0, %s29
      %s33 = sphi 0, %s30
      %s34 = sphi 0, %s31
      %s35 = sphi 0, %s32
      %s51 = sphi 0, %s53
      %s54 = sphi 0, %s51
      %s55 = sphi 0, %s54
      %s71 = sphi 0, %s55
      %s79 = sphi 0, %s81
      %s82 = sphi 0, %s79
      %s83 = sphi 0, %s82
      %s99 = sphi 0, %s83
      %s107 = sphi 0, %s109
      %s110 = sphi 0, %s107
      %s111 = sphi 0, %s110
      %s127 = sphi 0, %s111
      %s135 = sphi 0, %s137
      %s138 = sphi 0, %s135
      %s139 = sphi 0, %s138
      %s155 = sphi 0, %s139
    $region4: #{tpu_custom_call.1} parent=1 // loop_header_branch
      %23 = sbr.rel (%p21) target = $region8
    $region5: #{tpu_custom_call.1} parent=1 // loop_body
      %s25 = ssub.s32 %s20, 1
      %s26 = ssub.s32 %s20, 2
      %s36 = sadd.s32 1, %s29
      %p37 = scmp.ge.s32.totalorder %s36, 1
      %s38 = scalar_select %p37, 0, %s36
      %s39 = sadd.s32 1, %s28
      %s40 = scalar_select %p37, %s39, %s28
      %p41 = scmp.ge.s32.totalorder %s40, 1
      %s42 = scalar_select %p41, 0, %s40
      %s43 = sadd.s32 1, %s27
      %s44 = scalar_select %p41, %s43, %s27
      %p45 = scmp.ge.s32.totalorder %s44, 2
      %s46 = scalar_select %p45, 0, %s44
      %s47 = ssub.s32 %s27, %s46
      %s48 = ssub.s32 %s29, %s38
      %s49 = sor.u32 %s47, %s48
      %p50 = scmp.eq.s32.totalorder %s49, 0
      %s52 = sadd.s32 %s51, 1
      %s53 = scalar_select %p50, %s51, %s52
      %p56 = pneg %p50
      %p57 = scmp.eq.s32.totalorder %s20, 1
      %p58 = por %p56, %p57
      %p59 = scmp.ne.s32.totalorder %s51, %s54
      %p60 = scmp.eq.s32.totalorder %s20, 0
      %p61 = por %p59, %p60
      %p62 = scmp.ne.s32.totalorder %s51, %s54
      %p63 = scmp.eq.s32.totalorder %s25, 1
      %p64 = por %p62, %p63
      %p65 = scmp.ne.s32.totalorder %s54, %s55
      %p66 = scmp.eq.s32.totalorder %s25, 0
      %p67 = por %p65, %p66
      %p68 = scmp.ne.s32.totalorder %s54, %s55
      %p69 = scmp.eq.s32.totalorder %s26, 1
      %p70 = por %p68, %p69
      %p72 = scmp.ne.s32.totalorder %s55, %s71
      %p73 = scmp.eq.s32.totalorder %s26, 0
      %p74 = por %p72, %p73
      %s75 = ssub.s32 %s29, %s38
      %s76 = ssub.s32 %s28, %s42
      %s77 = sor.u32 %s75, %s76
      %p78 = scmp.eq.s32.totalorder %s77, 0
      %s80 = sadd.s32 %s79, 1
      %s81 = scalar_select %p78, %s79, %s80
      %p84 = pneg %p78
      %p85 = scmp.eq.s32.totalorder %s20, 1
      %p86 = por %p84, %p85
      %p87 = scmp.ne.s32.totalorder %s79, %s82
      %p88 = scmp.eq.s32.totalorder %s20, 0
      %p89 = por %p87, %p88
      %p90 = scmp.ne.s32.totalorder %s79, %s82
      %p91 = scmp.eq.s32.totalorder %s25, 1
      %p92 = por %p90, %p91
      %p93 = scmp.ne.s32.totalorder %s82, %s83
      %p94 = scmp.eq.s32.totalorder %s25, 0
      %p95 = por %p93, %p94
      %p96 = scmp.ne.s32.totalorder %s82, %s83
      %p97 = scmp.eq.s32.totalorder %s26, 1
      %p98 = por %p96, %p97
      %p100 = scmp.ne.s32.totalorder %s83, %s99
      %p101 = scmp.eq.s32.totalorder %s26, 0
      %p102 = por %p100, %p101
      %s103 = ssub.s32 %s27, %s46
      %s104 = ssub.s32 %s28, %s42
      %s105 = sor.u32 %s103, %s104
      %p106 = scmp.eq.s32.totalorder %s105, 0
      %s108 = sadd.s32 %s107, 1
      %s109 = scalar_select %p106, %s107, %s108
      %p112 = pneg %p106
      %p113 = scmp.eq.s32.totalorder %s20, 1
      %p114 = por %p112, %p113
      %p115 = scmp.ne.s32.totalorder %s107, %s110
      %p116 = scmp.eq.s32.totalorder %s20, 0
      %p117 = por %p115, %p116
      %p118 = scmp.ne.s32.totalorder %s107, %s110
      %p119 = scmp.eq.s32.totalorder %s25, 1
      %p120 = por %p118, %p119
      %p121 = scmp.ne.s32.totalorder %s110, %s111
      %p122 = scmp.eq.s32.totalorder %s25, 0
      %p123 = por %p121, %p122
      %p124 = scmp.ne.s32.totalorder %s110, %s111
      %p125 = scmp.eq.s32.totalorder %s26, 1
      %p126 = por %p124, %p125
      %p128 = scmp.ne.s32.totalorder %s111, %s127
      %p129 = scmp.eq.s32.totalorder %s26, 0
      %p130 = por %p128, %p129
      %s131 = ssub.s32 %s27, %s46
      %s132 = ssub.s32 %s28, %s42
      %s133 = sor.u32 %s131, %s132
      %p134 = scmp.eq.s32.totalorder %s133, 0
      %s136 = sadd.s32 %s135, 1
      %s137 = scalar_select %p134, %s135, %s136
      %p140 = pneg %p134
      %p141 = scmp.eq.s32.totalorder %s20, 1
      %p142 = por %p140, %p141
      %p143 = scmp.ne.s32.totalorder %s135, %s138
      %p144 = scmp.eq.s32.totalorder %s20, 0
      %p145 = por %p143, %p144
      %p146 = scmp.ne.s32.totalorder %s135, %s138
      %p147 = scmp.eq.s32.totalorder %s25, 1
      %p148 = por %p146, %p147
      %p149 = scmp.ne.s32.totalorder %s138, %s139
      %p150 = scmp.eq.s32.totalorder %s25, 0
      %p151 = por %p149, %p150
      %p152 = scmp.ne.s32.totalorder %s138, %s139
      %p153 = scmp.eq.s32.totalorder %s26, 1
      %p154 = por %p152, %p153
      %p156 = scmp.ne.s32.totalorder %s139, %s155
      %p157 = scmp.eq.s32.totalorder %s26, 0
      %p158 = por %p156, %p157
      %p159 = scmp.le.s32.totalorder 1, %s20
      %p160 = scmp.lt.s32.totalorder %s20, 3
      %p161 = pnand %p159, %p160
      %p162 = pneg %p161
      // Predicated region
      $region9: #{tpu_custom_call.1} parent=5 // pred_check
        _
      $region10: #{tpu_custom_call.1} parent=5 // pred_check_branch
        %164 = sbr.rel (%p161) target = $region12
      $region11: #{tpu_custom_call.1} parent=5 // pred_region
        %s165 = ssub.s32 %s20, 1
        // Predicated region
        $region13: #{tpu_custom_call.1} parent=11 // pred_check
          %p166 = pneg %p95
        $region14: #{tpu_custom_call.1} parent=11 // pred_check_branch
          %168 = sbr.rel (%p166) target = $region16
        $region15: #{tpu_custom_call.1} parent=11 // pred_region
          %s169 = smul.u32 16, %s32
          %s171 = ssub.s32 1024, 1024
          %172 = vsyncadd [#allocation7], %s171
          %s173 = sadd.s32 %s31, %s169
          %s174 = smul.addr %s173, 64
          %s175 = scalar_lea.hbm %s1, %s174
          %s176 = sshll.u32 [#allocation6], 4
          %s177 = int_to_ptr.vmem [resolvable:$true] %s176
          %182 = dma.hbm_to_vmem [thread:$0]  %s175, 1024, %s177, [#allocation7], 64, 64, 4
        $region16: #{tpu_custom_call.1} parent=11 // pred_fallthru
          _
      $region12: #{tpu_custom_call.1} parent=5 // pred_fallthru
        _
      %p183 = scmp.lt.s32.totalorder %s20, 2
      // Predicated region
      $region17: #{tpu_custom_call.1} parent=5 // pred_check
        %p184 = pneg %p183
      $region18: #{tpu_custom_call.1} parent=5 // pred_check_branch
        %186 = sbr.rel (%p184) target = $region20
      $region19: #{tpu_custom_call.1} parent=5 // pred_region
        // Predicated region
        $region21: #{tpu_custom_call.1} parent=19 // pred_check
          %p187 = pneg %p61
        $region22: #{tpu_custom_call.1} parent=19 // pred_check_branch
          %189 = sbr.rel (%p187) target = $region24
        $region23: #{tpu_custom_call.1} parent=19 // pred_region
          %s190 = sand.u32 %s51, 1
          %s191 = scalar_lea.sflag [#allocation4], %s190
          %s192 = sand.u32 %s51, 1
          %s193 = smul.addr %s192, 128
          %s194 = scalar_lea.vmem [#allocation3], %s193
          %s195 = smul.u32 32, %s27
          %s197 = ssub.s32 2048, 2048
          %198 = vsyncadd %s191, %s197
          %s199 = sadd.s32 %s29, %s195
          %s200 = smul.addr %s199, 64
          %s201 = scalar_lea.hbm %s0, %s200
          %s202 = sshll.u32 %s194, 4
          %s203 = int_to_ptr.vmem [resolvable:$true] %s202
          %208 = dma.hbm_to_vmem [thread:$0]  %s201, 2048, %s203, %s191, 64, 64, 4
        $region24: #{tpu_custom_call.1} parent=19 // pred_fallthru
          _
      $region20: #{tpu_custom_call.1} parent=5 // pred_fallthru
        _
      %p209 = scmp.le.s32.totalorder 1, %s20
      %p210 = scmp.lt.s32.totalorder %s20, 3
      %p211 = pnand %p209, %p210
      %p212 = pneg %p211
      // Predicated region
      $region25: #{tpu_custom_call.1} parent=5 // pred_check
        _
      $region26: #{tpu_custom_call.1} parent=5 // pred_check_branch
        %214 = sbr.rel (%p211) target = $region28
      $region27: #{tpu_custom_call.1} parent=5 // pred_region
        %s215 = ssub.s32 %s20, 1
        %s216 = sand.u32 %s54, 1
        %s217 = scalar_lea.sflag [#allocation4], %s216
        %s218 = sand.u32 %s54, 1
        %s219 = smul.addr %s218, 128
        %s220 = scalar_lea.vmem [#allocation3], %s219
        // Predicated region
        $region29: #{tpu_custom_call.1} parent=27 // pred_check
          %p221 = pneg %p67
        $region30: #{tpu_custom_call.1} parent=27 // pred_check_branch
          %223 = sbr.rel (%p221) target = $region32
        $region31: #{tpu_custom_call.1} parent=27 // pred_region
          %224 = dma.done %s217, 2048
        $region32: #{tpu_custom_call.1} parent=27 // pred_fallthru
          _
        // Predicated region
        $region33: #{tpu_custom_call.1} parent=27 // pred_check
          %p225 = pneg %p95
        $region34: #{tpu_custom_call.1} parent=27 // pred_check_branch
          %227 = sbr.rel (%p225) target = $region36
        $region35: #{tpu_custom_call.1} parent=27 // pred_region
          %228 = dma.done [#allocation7], 1024
        $region36: #{tpu_custom_call.1} parent=27 // pred_fallthru
          _
        %s229 = sand.u32 %s54, 1
        %s230 = scalar_lea.sflag [#allocation4], %s229
        %s231 = sand.u32 %s54, 1
        %s232 = smul.addr %s231, 128
        %s233 = scalar_lea.vmem [#allocation3], %s232
        %p234 = pneg %p67
        %p235 = pneg %p64
        %p236 = pneg %p95
        %p237 = pneg %p92
        %p238 = pneg %p123
        %p239 = pneg %p120
        %s240 = sand.u32 %s110, 1
        %s241 = scalar_lea.sflag [#allocation5], %s240
        %s242 = sand.u32 %s110, 1
        %s243 = smul.addr %s242, 256
        %s244 = scalar_lea.vmem [#allocation8], %s243
        %p245 = pneg %p151
        %p246 = pneg %p148
        %s247 = sand.u32 %s138, 1
        %s248 = scalar_lea.sflag [#allocation10], %s247
        %s249 = sand.u32 %s138, 1
        %s250 = smul.addr %s249, 8
        %s251 = scalar_lea.vmem [#allocation9], %s250
        %s252 = smul.u32 32, %s30
        %s253 = smul.u32 16, %s32
        %s254 = smul.u32 32, %s30
        %p256 = scmp.eq.s32.totalorder %s32, 0
        // Predicated region
        $region37: #{tpu_custom_call.1} parent=27 // pred_check
          %p257 = pneg %p256
        $region38: #{tpu_custom_call.1} parent=27 // pred_check_branch
          %259 = sbr.rel (%p257) target = $region40
        $region39: #{tpu_custom_call.1} parent=27 // pred_region
          %260 = vst [vmem:[#allocation2] sm:$0xff] 0.0
          %261 = vst [vmem:[#allocation2 + $0x8] sm:$0xff] 0.0
          %262 = vst [vmem:[#allocation2 + $0x10] sm:$0xff] 0.0
          %263 = vst [vmem:[#allocation2 + $0x18] sm:$0xff] 0.0
          %264 = vst [vmem:[#allocation2 + $0x20] sm:$0xff] 0.0
          %265 = vst [vmem:[#allocation2 + $0x28] sm:$0xff] 0.0
          %266 = vst [vmem:[#allocation2 + $0x30] sm:$0xff] 0.0
          %267 = vst [vmem:[#allocation2 + $0x38] sm:$0xff] 0.0
          %268 = vst [vmem:[#allocation2 + $0x40] sm:$0xff] 0.0
          %269 = vst [vmem:[#allocation2 + $0x48] sm:$0xff] 0.0
          %270 = vst [vmem:[#allocation2 + $0x50] sm:$0xff] 0.0
          %271 = vst [vmem:[#allocation2 + $0x58] sm:$0xff] 0.0
          %272 = vst [vmem:[#allocation2 + $0x60] sm:$0xff] 0.0
          %273 = vst [vmem:[#allocation2 + $0x68] sm:$0xff] 0.0
          %274 = vst [vmem:[#allocation2 + $0x70] sm:$0xff] 0.0
          %275 = vst [vmem:[#allocation2 + $0x78] sm:$0xff] 0.0
          %276 = vst [vmem:[#allocation2 + $0x80] sm:$0xff] 0.0
          %277 = vst [vmem:[#allocation2 + $0x88] sm:$0xff] 0.0
          %278 = vst [vmem:[#allocation2 + $0x90] sm:$0xff] 0.0
          %279 = vst [vmem:[#allocation2 + $0x98] sm:$0xff] 0.0
          %280 = vst [vmem:[#allocation2 + $0xa0] sm:$0xff] 0.0
          %281 = vst [vmem:[#allocation2 + $0xa8] sm:$0xff] 0.0
          %282 = vst [vmem:[#allocation2 + $0xb0] sm:$0xff] 0.0
          %283 = vst [vmem:[#allocation2 + $0xb8] sm:$0xff] 0.0
          %284 = vst [vmem:[#allocation2 + $0xc0] sm:$0xff] 0.0
          %285 = vst [vmem:[#allocation2 + $0xc8] sm:$0xff] 0.0
          %286 = vst [vmem:[#allocation2 + $0xd0] sm:$0xff] 0.0
          %287 = vst [vmem:[#allocation2 + $0xd8] sm:$0xff] 0.0
          %288 = vst [vmem:[#allocation2 + $0xe0] sm:$0xff] 0.0
          %289 = vst [vmem:[#allocation2 + $0xe8] sm:$0xff] 0.0
          %290 = vst [vmem:[#allocation2 + $0xf0] sm:$0xff] 0.0
          %291 = vst [vmem:[#allocation2 + $0xf8] sm:$0xff] 0.0
        $region40: #{tpu_custom_call.1} parent=27 // pred_fallthru
          _
        %v292 = vld [vmem:[#allocation2] sm:$0xff]
        %v293 = vld [vmem:[#allocation2 + $0x8] sm:$0xff]
        %v294 = vld [vmem:[#allocation2 + $0x10] sm:$0xff]
        %v295 = vld [vmem:[#allocation2 + $0x18] sm:$0xff]
        %v296 = vld [vmem:[#allocation2 + $0x20] sm:$0xff]
        %v297 = vld [vmem:[#allocation2 + $0x28] sm:$0xff]
        %v298 = vld [vmem:[#allocation2 + $0x30] sm:$0xff]
        %v299 = vld [vmem:[#allocation2 + $0x38] sm:$0xff]
        %v300 = vld [vmem:[#allocation2 + $0x40] sm:$0xff]
        %v301 = vld [vmem:[#allocation2 + $0x48] sm:$0xff]
        %v302 = vld [vmem:[#allocation2 + $0x50] sm:$0xff]
        %v303 = vld [vmem:[#allocation2 + $0x58] sm:$0xff]
        %v304 = vld [vmem:[#allocation2 + $0x60] sm:$0xff]
        %v305 = vld [vmem:[#allocation2 + $0x68] sm:$0xff]
        %v306 = vld [vmem:[#allocation2 + $0x70] sm:$0xff]
        %v307 = vld [vmem:[#allocation2 + $0x78] sm:$0xff]
        %v308 = vld [vmem:[#allocation2 + $0x80] sm:$0xff]
        %v309 = vld [vmem:[#allocation2 + $0x88] sm:$0xff]
        %v310 = vld [vmem:[#allocation2 + $0x90] sm:$0xff]
        %v311 = vld [vmem:[#allocation2 + $0x98] sm:$0xff]
        %v312 = vld [vmem:[#allocation2 + $0xa0] sm:$0xff]
        %v313 = vld [vmem:[#allocation2 + $0xa8] sm:$0xff]
        %v314 = vld [vmem:[#allocation2 + $0xb0] sm:$0xff]
        %v315 = vld [vmem:[#allocation2 + $0xb8] sm:$0xff]
        %v316 = vld [vmem:[#allocation2 + $0xc0] sm:$0xff]
        %v317 = vld [vmem:[#allocation2 + $0xc8] sm:$0xff]
        %v318 = vld [vmem:[#allocation2 + $0xd0] sm:$0xff]
        %v319 = vld [vmem:[#allocation2 + $0xd8] sm:$0xff]
        %v320 = vld [vmem:[#allocation2 + $0xe0] sm:$0xff]
        %v321 = vld [vmem:[#allocation2 + $0xe8] sm:$0xff]
        %v322 = vld [vmem:[#allocation2 + $0xf0] sm:$0xff]
        %v323 = vld [vmem:[#allocation2 + $0xf8] sm:$0xff]
        %v324 = vld [vmem:[%s220] sm:$0xf]
        %v325 = vld [vmem:[%s220 + $0x4] sm:$0xf]
        %v326 = vld [vmem:[%s220 + $0x8] sm:$0xf]
        %v327 = vld [vmem:[%s220 + $0xc] sm:$0xf]
        %v328 = vld [vmem:[%s220 + $0x10] sm:$0xf]
        %v329 = vld [vmem:[%s220 + $0x14] sm:$0xf]
        %v330 = vld [vmem:[%s220 + $0x18] sm:$0xf]
        %v331 = vld [vmem:[%s220 + $0x1c] sm:$0xf]
        %v332 = vld [vmem:[%s220 + $0x20] sm:$0xf]
        %v333 = vld [vmem:[%s220 + $0x24] sm:$0xf]
        %v334 = vld [vmem:[%s220 + $0x28] sm:$0xf]
        %v335 = vld [vmem:[%s220 + $0x2c] sm:$0xf]
        %v336 = vld [vmem:[%s220 + $0x30] sm:$0xf]
        %v337 = vld [vmem:[%s220 + $0x34] sm:$0xf]
        %v338 = vld [vmem:[%s220 + $0x38] sm:$0xf]
        %v339 = vld [vmem:[%s220 + $0x3c] sm:$0xf]
        %v340 = vld [vmem:[%s220 + $0x40] sm:$0xf]
        %v341 = vld [vmem:[%s220 + $0x44] sm:$0xf]
        %v342 = vld [vmem:[%s220 + $0x48] sm:$0xf]
        %v343 = vld [vmem:[%s220 + $0x4c] sm:$0xf]
        %v344 = vld [vmem:[%s220 + $0x50] sm:$0xf]
        %v345 = vld [vmem:[%s220 + $0x54] sm:$0xf]
        %v346 = vld [vmem:[%s220 + $0x58] sm:$0xf]
        %v347 = vld [vmem:[%s220 + $0x5c] sm:$0xf]
        %v348 = vld [vmem:[%s220 + $0x60] sm:$0xf]
        %v349 = vld [vmem:[%s220 + $0x64] sm:$0xf]
        %v350 = vld [vmem:[%s220 + $0x68] sm:$0xf]
        %v351 = vld [vmem:[%s220 + $0x6c] sm:$0xf]
        %v352 = vld [vmem:[%s220 + $0x70] sm:$0xf]
        %v353 = vld [vmem:[%s220 + $0x74] sm:$0xf]
        %v354 = vld [vmem:[%s220 + $0x78] sm:$0xf]
        %v355 = vld [vmem:[%s220 + $0x7c] sm:$0xf]
        %v356 = vld [vmem:[#allocation6] sm:$0xf]
        %v357 = vld [vmem:[#allocation6 + $0x4] sm:$0xf]
        %v358 = vld [vmem:[#allocation6 + $0x8] sm:$0xf]
        %v359 = vld [vmem:[#allocation6 + $0xc] sm:$0xf]
        %v360 = vld [vmem:[#allocation6 + $0x10] sm:$0xf]
        %v361 = vld [vmem:[#allocation6 + $0x14] sm:$0xf]
        %v362 = vld [vmem:[#allocation6 + $0x18] sm:$0xf]
        %v363 = vld [vmem:[#allocation6 + $0x1c] sm:$0xf]
        %v364 = vld [vmem:[#allocation6 + $0x20] sm:$0xf]
        %v365 = vld [vmem:[#allocation6 + $0x24] sm:$0xf]
        %v366 = vld [vmem:[#allocation6 + $0x28] sm:$0xf]
        %v367 = vld [vmem:[#allocation6 + $0x2c] sm:$0xf]
        %v368 = vld [vmem:[#allocation6 + $0x30] sm:$0xf]
        %v369 = vld [vmem:[#allocation6 + $0x34] sm:$0xf]
        %v370 = vld [vmem:[#allocation6 + $0x38] sm:$0xf]
        %v371 = vld [vmem:[#allocation6 + $0x3c] sm:$0xf]
        %v404 = vunpack.c.l.b16 %v324
        %v405 = vunpack.c.l.b16 %v325
        %v406 = vunpack.c.l.b16 %v326
        %v407 = vunpack.c.l.b16 %v327
        %v408 = vunpack.c.l.b16 %v328
        %v409 = vunpack.c.l.b16 %v329
        %v410 = vunpack.c.l.b16 %v330
        %v411 = vunpack.c.l.b16 %v331
        %v412 = vunpack.c.l.b16 %v332
        %v413 = vunpack.c.l.b16 %v333
        %v414 = vunpack.c.l.b16 %v334
        %v415 = vunpack.c.l.b16 %v335
        %v416 = vunpack.c.l.b16 %v336
        %v417 = vunpack.c.l.b16 %v337
        %v418 = vunpack.c.l.b16 %v338
        %v419 = vunpack.c.l.b16 %v339
        %v420 = vunpack.c.l.b16 %v340
        %v421 = vunpack.c.l.b16 %v341
        %v422 = vunpack.c.l.b16 %v342
        %v423 = vunpack.c.l.b16 %v343
        %v424 = vunpack.c.l.b16 %v344
        %v425 = vunpack.c.l.b16 %v345
        %v426 = vunpack.c.l.b16 %v346
        %v427 = vunpack.c.l.b16 %v347
        %v428 = vunpack.c.l.b16 %v348
        %v429 = vunpack.c.l.b16 %v349
        %v430 = vunpack.c.l.b16 %v350
        %v431 = vunpack.c.l.b16 %v351
        %v432 = vunpack.c.l.b16 %v352
        %v433 = vunpack.c.l.b16 %v353
        %v434 = vunpack.c.l.b16 %v354
        %v435 = vunpack.c.l.b16 %v355
        %v436 = vpack.c.b16 %v405, %v404
        %v437 = vpack.c.b16 %v407, %v406
        %v438 = vpack.c.b16 %v409, %v408
        %v439 = vpack.c.b16 %v411, %v410
        %v440 = vpack.c.b16 %v413, %v412
        %v441 = vpack.c.b16 %v415, %v414
        %v442 = vpack.c.b16 %v417, %v416
        %v443 = vpack.c.b16 %v419, %v418
        %v444 = vpack.c.b16 %v421, %v420
        %v445 = vpack.c.b16 %v423, %v422
        %v446 = vpack.c.b16 %v425, %v424
        %v447 = vpack.c.b16 %v427, %v426
        %v448 = vpack.c.b16 %v429, %v428
        %v449 = vpack.c.b16 %v431, %v430
        %v450 = vpack.c.b16 %v433, %v432
        %v451 = vpack.c.b16 %v435, %v434
        %v484 = vunpack.c.l.b16 %v356
        %v485 = vunpack.c.l.b16 %v357
        %v486 = vunpack.c.l.b16 %v358
        %v487 = vunpack.c.l.b16 %v359
        %v488 = vunpack.c.l.b16 %v360
        %v489 = vunpack.c.l.b16 %v361
        %v490 = vunpack.c.l.b16 %v362
        %v491 = vunpack.c.l.b16 %v363
        %v492 = vunpack.c.l.b16 %v364
        %v493 = vunpack.c.l.b16 %v365
        %v494 = vunpack.c.l.b16 %v366
        %v495 = vunpack.c.l.b16 %v367
        %v496 = vunpack.c.l.b16 %v368
        %v497 = vunpack.c.l.b16 %v369
        %v498 = vunpack.c.l.b16 %v370
        %v499 = vunpack.c.l.b16 %v371
        %v500 = vpack.c.b16 %v485, %v484
        %v501 = vpack.c.b16 %v487, %v486
        %v502 = vpack.c.b16 %v489, %v488
        %v503 = vpack.c.b16 %v491, %v490
        %v504 = vpack.c.b16 %v493, %v492
        %v505 = vpack.c.b16 %v495, %v494
        %v506 = vpack.c.b16 %v497, %v496
        %v507 = vpack.c.b16 %v499, %v498
        %516 = vmatprep.subr.bf16.mxu0 0
        %517 = vmatpush1.bf16.msra.mxu0 %v500
        %518 = vmatprep.subr.bf16.mxu0 0
        %519 = vmatpush1.bf16.msra.mxu0 %v501
        %520 = vmatprep.subr.bf16.mxu0 0
        %521 = vmatpush1.bf16.msra.mxu0 %v502
        %522 = vmatprep.subr.bf16.mxu0 0
        %523 = vmatpush1.bf16.msra.mxu0 %v503
        %524 = vmatprep.subr.bf16.mxu0 0
        %525 = vmatpush1.bf16.msra.mxu0 %v504
        %526 = vmatprep.subr.bf16.mxu0 0
        %527 = vmatpush1.bf16.msra.mxu0 %v505
        %528 = vmatprep.subr.bf16.mxu0 0
        %529 = vmatpush1.bf16.msra.mxu0 %v506
        %530 = vmatprep.subr.bf16.mxu0 0
        %531 = vmatpush1.bf16.msra.mxu0 %v507
        %532 = vmatprep.subr.bf16.mxu0 0
        %533 = vmatpush1.bf16.msra.mxu0 0
        %534 = vmatprep.subr.bf16.mxu0 0
        %535 = vmatpush1.bf16.msra.mxu0 0
        %536 = vmatprep.subr.bf16.mxu0 0
        %537 = vmatpush1.bf16.msra.mxu0 0
        %538 = vmatprep.subr.bf16.mxu0 0
        %539 = vmatpush1.bf16.msra.mxu0 0
        %540 = vmatprep.subr.bf16.mxu0 0
        %541 = vmatpush1.bf16.msra.mxu0 0
        %542 = vmatprep.subr.bf16.mxu0 0
        %543 = vmatpush1.bf16.msra.mxu0 0
        %544 = vmatprep.subr.bf16.mxu0 0
        %545 = vmatpush1.bf16.msra.mxu0 0
        %546 = vmatprep.subr.bf16.mxu0 0
        %547 = vmatpush1.bf16.msra.mxu0 0
        %548 = vmatprep.mubr.bf16.mxu0 0
        %549 = vmatmul.mubr.bf16.gmra.mrb[0].mxu0 %v436
        %v550 = vpop.f32.mrb[0].mxu0
        %v551 = vadd.f32 0.0, %v550
        %v552 = vpop.f32.mrb[0].mxu0
        %v553 = vpop.f32.mrb[0].mxu0
        %v554 = vadd.f32 0.0, %v553
        %v555 = vpop.f32.mrb[0].mxu0
        %556 = vmatprep.mubr.bf16.mxu0 0
        %557 = vmatmul.mubr.bf16.gmra.mrb[0].mxu0 %v437
        %v558 = vpop.f32.mrb[0].mxu0
        %v559 = vadd.f32 0.0, %v558
        %v560 = vpop.f32.mrb[0].mxu0
        %v561 = vpop.f32.mrb[0].mxu0
        %v562 = vadd.f32 0.0, %v561
        %v563 = vpop.f32.mrb[0].mxu0
        %564 = vmatprep.mubr.bf16.mxu0 0
        %565 = vmatmul.mubr.bf16.gmra.mrb[0].mxu0 %v438
        %v566 = vpop.f32.mrb[0].mxu0
        %v567 = vadd.f32 0.0, %v566
        %v568 = vpop.f32.mrb[0].mxu0
        %v569 = vpop.f32.mrb[0].mxu0
        %v570 = vadd.f32 0.0, %v569
        %v571 = vpop.f32.mrb[0].mxu0
        %572 = vmatprep.mubr.bf16.mxu0 0
        %573 = vmatmul.mubr.bf16.gmra.mrb[0].mxu0 %v439
        %v574 = vpop.f32.mrb[0].mxu0
        %v575 = vadd.f32 0.0, %v574
        %v576 = vpop.f32.mrb[0].mxu0
        %v577 = vpop.f32.mrb[0].mxu0
        %v578 = vadd.f32 0.0, %v577
        %v579 = vpop.f32.mrb[0].mxu0
        %580 = vmatprep.mubr.bf16.mxu0 0
        %581 = vmatmul.mubr.bf16.gmra.mrb[0].mxu0 %v440
        %v582 = vpop.f32.mrb[0].mxu0
        %v583 = vadd.f32 0.0, %v582
        %v584 = vpop.f32.mrb[0].mxu0
        %v585 = vpop.f32.mrb[0].mxu0
        %v586 = vadd.f32 0.0, %v585
        %v587 = vpop.f32.mrb[0].mxu0
        %588 = vmatprep.mubr.bf16.mxu0 0
        %589 = vmatmul.mubr.bf16.gmra.mrb[0].mxu0 %v441
        %v590 = vpop.f32.mrb[0].mxu0
        %v591 = vadd.f32 0.0, %v590
        %v592 = vpop.f32.mrb[0].mxu0
        %v593 = vpop.f32.mrb[0].mxu0
        %v594 = vadd.f32 0.0, %v593
        %v595 = vpop.f32.mrb[0].mxu0
        %596 = vmatprep.mubr.bf16.mxu0 0
        %597 = vmatmul.mubr.bf16.gmra.mrb[0].mxu0 %v442
        %v598 = vpop.f32.mrb[0].mxu0
        %v599 = vadd.f32 0.0, %v598
        %v600 = vpop.f32.mrb[0].mxu0
        %v601 = vpop.f32.mrb[0].mxu0
        %v602 = vadd.f32 0.0, %v601
        %v603 = vpop.f32.mrb[0].mxu0
        %604 = vmatprep.mubr.bf16.mxu0 0
        %605 = vmatmul.mubr.bf16.gmra.mrb[0].mxu0 %v443
        %v606 = vpop.f32.mrb[0].mxu0
        %v607 = vadd.f32 0.0, %v606
        %v608 = vpop.f32.mrb[0].mxu0
        %v609 = vpop.f32.mrb[0].mxu0
        %v610 = vadd.f32 0.0, %v609
        %v611 = vpop.f32.mrb[0].mxu0
        %612 = vmatprep.mubr.bf16.mxu0 0
        %613 = vmatmul.mubr.bf16.gmra.mrb[0].mxu0 %v444
        %v614 = vpop.f32.mrb[0].mxu0
        %v615 = vadd.f32 0.0, %v614
        %v616 = vpop.f32.mrb[0].mxu0
        %v617 = vpop.f32.mrb[0].mxu0
        %v618 = vadd.f32 0.0, %v617
        %v619 = vpop.f32.mrb[0].mxu0
        %620 = vmatprep.mubr.bf16.mxu0 0
        %621 = vmatmul.mubr.bf16.gmra.mrb[0].mxu0 %v445
        %v622 = vpop.f32.mrb[0].mxu0
        %v623 = vadd.f32 0.0, %v622
        %v624 = vpop.f32.mrb[0].mxu0
        %v625 = vpop.f32.mrb[0].mxu0
        %v626 = vadd.f32 0.0, %v625
        %v627 = vpop.f32.mrb[0].mxu0
        %628 = vmatprep.mubr.bf16.mxu0 0
        %629 = vmatmul.mubr.bf16.gmra.mrb[0].mxu0 %v446
        %v630 = vpop.f32.mrb[0].mxu0
        %v631 = vadd.f32 0.0, %v630
        %v632 = vpop.f32.mrb[0].mxu0
        %v633 = vpop.f32.mrb[0].mxu0
        %v634 = vadd.f32 0.0, %v633
        %v635 = vpop.f32.mrb[0].mxu0
        %636 = vmatprep.mubr.bf16.mxu0 0
        %637 = vmatmul.mubr.bf16.gmra.mrb[0].mxu0 %v447
        %v638 = vpop.f32.mrb[0].mxu0
        %v639 = vadd.f32 0.0, %v638
        %v640 = vpop.f32.mrb[0].mxu0
        %v641 = vpop.f32.mrb[0].mxu0
        %v642 = vadd.f32 0.0, %v641
        %v643 = vpop.f32.mrb[0].mxu0
        %644 = vmatprep.mubr.bf16.mxu0 0
        %645 = vmatmul.mubr.bf16.gmra.mrb[0].mxu0 %v448
        %v646 = vpop.f32.mrb[0].mxu0
        %v647 = vadd.f32 0.0, %v646
        %v648 = vpop.f32.mrb[0].mxu0
        %v649 = vpop.f32.mrb[0].mxu0
        %v650 = vadd.f32 0.0, %v649
        %v651 = vpop.f32.mrb[0].mxu0
        %652 = vmatprep.mubr.bf16.mxu0 0
        %653 = vmatmul.mubr.bf16.gmra.mrb[0].mxu0 %v449
        %v654 = vpop.f32.mrb[0].mxu0
        %v655 = vadd.f32 0.0, %v654
        %v656 = vpop.f32.mrb[0].mxu0
        %v657 = vpop.f32.mrb[0].mxu0
        %v658 = vadd.f32 0.0, %v657
        %v659 = vpop.f32.mrb[0].mxu0
        %660 = vmatprep.mubr.bf16.mxu0 0
        %661 = vmatmul.mubr.bf16.gmra.mrb[0].mxu0 %v450
        %v662 = vpop.f32.mrb[0].mxu0
        %v663 = vadd.f32 0.0, %v662
        %v664 = vpop.f32.mrb[0].mxu0
        %v665 = vpop.f32.mrb[0].mxu0
        %v666 = vadd.f32 0.0, %v665
        %v667 = vpop.f32.mrb[0].mxu0
        %668 = vmatprep.mubr.bf16.mxu0 0
        %669 = vmatmul.mubr.bf16.gmra.mrb[0].mxu0 %v451
        %v670 = vpop.f32.mrb[0].mxu0
        %v671 = vadd.f32 0.0, %v670
        %v672 = vpop.f32.mrb[0].mxu0
        %v673 = vpop.f32.mrb[0].mxu0
        %v674 = vadd.f32 0.0, %v673
        %v675 = vpop.f32.mrb[0].mxu0
        %676 = vdwg.mxu0
        %v677 = vadd.f32 %v292, %v551
        %v678 = vadd.f32 %v293, %v554
        %v679 = vadd.f32 %v294, %v559
        %v680 = vadd.f32 %v295, %v562
        %v681 = vadd.f32 %v296, %v567
        %v682 = vadd.f32 %v297, %v570
        %v683 = vadd.f32 %v298, %v575
        %v684 = vadd.f32 %v299, %v578
        %v685 = vadd.f32 %v300, %v583
        %v686 = vadd.f32 %v301, %v586
        %v687 = vadd.f32 %v302, %v591
        %v688 = vadd.f32 %v303, %v594
        %v689 = vadd.f32 %v304, %v599
        %v690 = vadd.f32 %v305, %v602
        %v691 = vadd.f32 %v306, %v607
        %v692 = vadd.f32 %v307, %v610
        %v693 = vadd.f32 %v308, %v615
        %v694 = vadd.f32 %v309, %v618
        %v695 = vadd.f32 %v310, %v623
        %v696 = vadd.f32 %v311, %v626
        %v697 = vadd.f32 %v312, %v631
        %v698 = vadd.f32 %v313, %v634
        %v699 = vadd.f32 %v314, %v639
        %v700 = vadd.f32 %v315, %v642
        %v701 = vadd.f32 %v316, %v647
        %v702 = vadd.f32 %v317, %v650
        %v703 = vadd.f32 %v318, %v655
        %v704 = vadd.f32 %v319, %v658
        %v705 = vadd.f32 %v320, %v663
        %v706 = vadd.f32 %v321, %v666
        %v707 = vadd.f32 %v322, %v671
        %v708 = vadd.f32 %v323, %v674
        %709 = vst [vmem:[#allocation2] sm:$0xff] %v677
        %710 = vst [vmem:[#allocation2 + $0x8] sm:$0xff] %v678
        %711 = vst [vmem:[#allocation2 + $0x10] sm:$0xff] %v679
        %712 = vst [vmem:[#allocation2 + $0x18] sm:$0xff] %v680
        %713 = vst [vmem:[#allocation2 + $0x20] sm:$0xff] %v681
        %714 = vst [vmem:[#allocation2 + $0x28] sm:$0xff] %v682
        %715 = vst [vmem:[#allocation2 + $0x30] sm:$0xff] %v683
        %716 = vst [vmem:[#allocation2 + $0x38] sm:$0xff] %v684
        %717 = vst [vmem:[#allocation2 + $0x40] sm:$0xff] %v685
        %718 = vst [vmem:[#allocation2 + $0x48] sm:$0xff] %v686
        %719 = vst [vmem:[#allocation2 + $0x50] sm:$0xff] %v687
        %720 = vst [vmem:[#allocation2 + $0x58] sm:$0xff] %v688
        %721 = vst [vmem:[#allocation2 + $0x60] sm:$0xff] %v689
        %722 = vst [vmem:[#allocation2 + $0x68] sm:$0xff] %v690
        %723 = vst [vmem:[#allocation2 + $0x70] sm:$0xff] %v691
        %724 = vst [vmem:[#allocation2 + $0x78] sm:$0xff] %v692
        %725 = vst [vmem:[#allocation2 + $0x80] sm:$0xff] %v693
        %726 = vst [vmem:[#allocation2 + $0x88] sm:$0xff] %v694
        %727 = vst [vmem:[#allocation2 + $0x90] sm:$0xff] %v695
        %728 = vst [vmem:[#allocation2 + $0x98] sm:$0xff] %v696
        %729 = vst [vmem:[#allocation2 + $0xa0] sm:$0xff] %v697
        %730 = vst [vmem:[#allocation2 + $0xa8] sm:$0xff] %v698
        %731 = vst [vmem:[#allocation2 + $0xb0] sm:$0xff] %v699
        %732 = vst [vmem:[#allocation2 + $0xb8] sm:$0xff] %v700
        %733 = vst [vmem:[#allocation2 + $0xc0] sm:$0xff] %v701
        %734 = vst [vmem:[#allocation2 + $0xc8] sm:$0xff] %v702
        %735 = vst [vmem:[#allocation2 + $0xd0] sm:$0xff] %v703
        %736 = vst [vmem:[#allocation2 + $0xd8] sm:$0xff] %v704
        %737 = vst [vmem:[#allocation2 + $0xe0] sm:$0xff] %v705
        %738 = vst [vmem:[#allocation2 + $0xe8] sm:$0xff] %v706
        %739 = vst [vmem:[#allocation2 + $0xf0] sm:$0xff] %v707
        %740 = vst [vmem:[#allocation2 + $0xf8] sm:$0xff] %v708
        // Predicated region
        $region41: #{tpu_custom_call.1} parent=27 // pred_check
          %p741 = pneg %p256
        $region42: #{tpu_custom_call.1} parent=27 // pred_check_branch
          %743 = sbr.rel (%p741) target = $region44
        $region43: #{tpu_custom_call.1} parent=27 // pred_region
          %v744 = vld [vmem:[#allocation2] sm:$0xff]
          %v745 = vld [vmem:[#allocation2 + $0x8] sm:$0xff]
          %v746 = vld [vmem:[#allocation2 + $0x10] sm:$0xff]
          %v747 = vld [vmem:[#allocation2 + $0x18] sm:$0xff]
          %v748 = vld [vmem:[#allocation2 + $0x20] sm:$0xff]
          %v749 = vld [vmem:[#allocation2 + $0x28] sm:$0xff]
          %v750 = vld [vmem:[#allocation2 + $0x30] sm:$0xff]
          %v751 = vld [vmem:[#allocation2 + $0x38] sm:$0xff]
          %v752 = vld [vmem:[#allocation2 + $0x40] sm:$0xff]
          %v753 = vld [vmem:[#allocation2 + $0x48] sm:$0xff]
          %v754 = vld [vmem:[#allocation2 + $0x50] sm:$0xff]
          %v755 = vld [vmem:[#allocation2 + $0x58] sm:$0xff]
          %v756 = vld [vmem:[#allocation2 + $0x60] sm:$0xff]
          %v757 = vld [vmem:[#allocation2 + $0x68] sm:$0xff]
          %v758 = vld [vmem:[#allocation2 + $0x70] sm:$0xff]
          %v759 = vld [vmem:[#allocation2 + $0x78] sm:$0xff]
          %v760 = vld [vmem:[#allocation2 + $0x80] sm:$0xff]
          %v761 = vld [vmem:[#allocation2 + $0x88] sm:$0xff]
          %v762 = vld [vmem:[#allocation2 + $0x90] sm:$0xff]
          %v763 = vld [vmem:[#allocation2 + $0x98] sm:$0xff]
          %v764 = vld [vmem:[#allocation2 + $0xa0] sm:$0xff]
          %v765 = vld [vmem:[#allocation2 + $0xa8] sm:$0xff]
          %v766 = vld [vmem:[#allocation2 + $0xb0] sm:$0xff]
          %v767 = vld [vmem:[#allocation2 + $0xb8] sm:$0xff]
          %v768 = vld [vmem:[#allocation2 + $0xc0] sm:$0xff]
          %v769 = vld [vmem:[#allocation2 + $0xc8] sm:$0xff]
          %v770 = vld [vmem:[#allocation2 + $0xd0] sm:$0xff]
          %v771 = vld [vmem:[#allocation2 + $0xd8] sm:$0xff]
          %v772 = vld [vmem:[#allocation2 + $0xe0] sm:$0xff]
          %v773 = vld [vmem:[#allocation2 + $0xe8] sm:$0xff]
          %v774 = vld [vmem:[#allocation2 + $0xf0] sm:$0xff]
          %v775 = vld [vmem:[#allocation2 + $0xf8] sm:$0xff]
          %776 = vst [vmem:[%s244] sm:$0xff] %v744
          %777 = vst [vmem:[%s244 + $0x8] sm:$0xff] %v745
          %778 = vst [vmem:[%s244 + $0x10] sm:$0xff] %v746
          %779 = vst [vmem:[%s244 + $0x18] sm:$0xff] %v747
          %780 = vst [vmem:[%s244 + $0x20] sm:$0xff] %v748
          %781 = vst [vmem:[%s244 + $0x28] sm:$0xff] %v749
          %782 = vst [vmem:[%s244 + $0x30] sm:$0xff] %v750
          %783 = vst [vmem:[%s244 + $0x38] sm:$0xff] %v751
          %784 = vst [vmem:[%s244 + $0x40] sm:$0xff] %v752
          %785 = vst [vmem:[%s244 + $0x48] sm:$0xff] %v753
          %786 = vst [vmem:[%s244 + $0x50] sm:$0xff] %v754
          %787 = vst [vmem:[%s244 + $0x58] sm:$0xff] %v755
          %788 = vst [vmem:[%s244 + $0x60] sm:$0xff] %v756
          %789 = vst [vmem:[%s244 + $0x68] sm:$0xff] %v757
          %790 = vst [vmem:[%s244 + $0x70] sm:$0xff] %v758
          %791 = vst [vmem:[%s244 + $0x78] sm:$0xff] %v759
          %792 = vst [vmem:[%s244 + $0x80] sm:$0xff] %v760
          %793 = vst [vmem:[%s244 + $0x88] sm:$0xff] %v761
          %794 = vst [vmem:[%s244 + $0x90] sm:$0xff] %v762
          %795 = vst [vmem:[%s244 + $0x98] sm:$0xff] %v763
          %796 = vst [vmem:[%s244 + $0xa0] sm:$0xff] %v764
          %797 = vst [vmem:[%s244 + $0xa8] sm:$0xff] %v765
          %798 = vst [vmem:[%s244 + $0xb0] sm:$0xff] %v766
          %799 = vst [vmem:[%s244 + $0xb8] sm:$0xff] %v767
          %800 = vst [vmem:[%s244 + $0xc0] sm:$0xff] %v768
          %801 = vst [vmem:[%s244 + $0xc8] sm:$0xff] %v769
          %802 = vst [vmem:[%s244 + $0xd0] sm:$0xff] %v770
          %803 = vst [vmem:[%s244 + $0xd8] sm:$0xff] %v771
          %804 = vst [vmem:[%s244 + $0xe0] sm:$0xff] %v772
          %805 = vst [vmem:[%s244 + $0xe8] sm:$0xff] %v773
          %806 = vst [vmem:[%s244 + $0xf0] sm:$0xff] %v774
          %807 = vst [vmem:[%s244 + $0xf8] sm:$0xff] %v775
          %v808 = vadd.f32 %v744, %v745
          %v809 = vadd.f32 %v808, %v746
          %v810 = vadd.f32 %v809, %v747
          %v811 = vadd.f32 %v810, %v748
          %v812 = vadd.f32 %v811, %v749
          %v813 = vadd.f32 %v812, %v750
          %v814 = vadd.f32 %v813, %v751
          %v815 = vadd.f32 %v814, %v752
          %v816 = vadd.f32 %v815, %v753
          %v817 = vadd.f32 %v816, %v754
          %v818 = vadd.f32 %v817, %v755
          %v819 = vadd.f32 %v818, %v756
          %v820 = vadd.f32 %v819, %v757
          %v821 = vadd.f32 %v820, %v758
          %v822 = vadd.f32 %v821, %v759
          %v823 = vadd.f32 %v822, %v760
          %v824 = vadd.f32 %v823, %v761
          %v825 = vadd.f32 %v824, %v762
          %v826 = vadd.f32 %v825, %v763
          %v827 = vadd.f32 %v826, %v764
          %v828 = vadd.f32 %v827, %v765
          %v829 = vadd.f32 %v828, %v766
          %v830 = vadd.f32 %v829, %v767
          %v831 = vadd.f32 %v830, %v768
          %v832 = vadd.f32 %v831, %v769
          %v833 = vadd.f32 %v832, %v770
          %v834 = vadd.f32 %v833, %v771
          %v835 = vadd.f32 %v834, %v772
          %v836 = vadd.f32 %v835, %v773
          %v837 = vadd.f32 %v836, %v774
          %v838 = vadd.f32 %v837, %v775
          %v839 = vrot.slane %v838, 4
          %v840 = vadd.f32 %v838, %v839
          %v841 = vrot.slane %v840, 2
          %v842 = vadd.f32 %v840, %v841
          %v843 = vrot.slane %v842, 1
          %v844 = vadd.f32 %v842, %v843
          %v845 = vmul.f32 %v744, %v744
          %v846 = vmul.f32 %v745, %v745
          %v847 = vmul.f32 %v746, %v746
          %v848 = vmul.f32 %v747, %v747
          %v849 = vmul.f32 %v748, %v748
          %v850 = vmul.f32 %v749, %v749
          %v851 = vmul.f32 %v750, %v750
          %v852 = vmul.f32 %v751, %v751
          %v853 = vmul.f32 %v752, %v752
          %v854 = vmul.f32 %v753, %v753
          %v855 = vmul.f32 %v754, %v754
          %v856 = vmul.f32 %v755, %v755
          %v857 = vmul.f32 %v756, %v756
          %v858 = vmul.f32 %v757, %v757
          %v859 = vmul.f32 %v758, %v758
          %v860 = vmul.f32 %v759, %v759
          %v861 = vmul.f32 %v760, %v760
          %v862 = vmul.f32 %v761, %v761
          %v863 = vmul.f32 %v762, %v762
          %v864 = vmul.f32 %v763, %v763
          %v865 = vmul.f32 %v764, %v764
          %v866 = vmul.f32 %v765, %v765
          %v867 = vmul.f32 %v766, %v766
          %v868 = vmul.f32 %v767, %v767
          %v869 = vmul.f32 %v768, %v768
          %v870 = vmul.f32 %v769, %v769
          %v871 = vmul.f32 %v770, %v770
          %v872 = vmul.f32 %v771, %v771
          %v873 = vmul.f32 %v772, %v772
          %v874 = vmul.f32 %v773, %v773
          %v875 = vmul.f32 %v774, %v774
          %v876 = vmul.f32 %v775, %v775
          %v877 = vadd.f32 %v845, %v846
          %v878 = vadd.f32 %v877, %v847
          %v879 = vadd.f32 %v878, %v848
          %v880 = vadd.f32 %v879, %v849
          %v881 = vadd.f32 %v880, %v850
          %v882 = vadd.f32 %v881, %v851
          %v883 = vadd.f32 %v882, %v852
          %v884 = vadd.f32 %v883, %v853
          %v885 = vadd.f32 %v884, %v854
          %v886 = vadd.f32 %v885, %v855
          %v887 = vadd.f32 %v886, %v856
          %v888 = vadd.f32 %v887, %v857
          %v889 = vadd.f32 %v888, %v858
          %v890 = vadd.f32 %v889, %v859
          %v891 = vadd.f32 %v890, %v860
          %v892 = vadd.f32 %v891, %v861
          %v893 = vadd.f32 %v892, %v862
          %v894 = vadd.f32 %v893, %v863
          %v895 = vadd.f32 %v894, %v864
          %v896 = vadd.f32 %v895, %v865
          %v897 = vadd.f32 %v896, %v866
          %v898 = vadd.f32 %v897, %v867
          %v899 = vadd.f32 %v898, %v868
          %v900 = vadd.f32 %v899, %v869
          %v901 = vadd.f32 %v900, %v870
          %v902 = vadd.f32 %v901, %v871
          %v903 = vadd.f32 %v902, %v872
          %v904 = vadd.f32 %v903, %v873
          %v905 = vadd.f32 %v904, %v874
          %v906 = vadd.f32 %v905, %v875
          %v907 = vadd.f32 %v906, %v876
          %v908 = vrot.slane %v907, 4
          %v909 = vadd.f32 %v907, %v908
          %v910 = vrot.slane %v909, 2
          %v911 = vadd.f32 %v909, %v910
          %v912 = vrot.slane %v911, 1
          %v913 = vadd.f32 %v911, %v912
          %v914 = vlaneseq
          %v915 = vshrl.u32 %v914, 7
          %vm916 = vcmp.eq.s32.totalorder %v915, 0
          %v917 = vsel %vm916, %v844, 0.0
          %vm918 = vcmp.eq.s32.totalorder %v915, 1
          %v919 = vsel %vm918, %v913, 0.0
          %v920 = vadd.f32 %v917, %v919
          %921 = vst [vmem:[%s251] sm:$0xff] %v920
        $region44: #{tpu_custom_call.1} parent=27 // pred_fallthru
          _
        %s922 = sand.u32 %s110, 1
        %s923 = scalar_lea.sflag [#allocation5], %s922
        %s924 = sand.u32 %s110, 1
        %s925 = smul.addr %s924, 256
        %s926 = scalar_lea.vmem [#allocation8], %s925
        %s927 = sand.u32 %s138, 1
        %s928 = scalar_lea.sflag [#allocation10], %s927
        %s929 = sand.u32 %s138, 1
        %s930 = smul.addr %s929, 8
        %s931 = scalar_lea.vmem [#allocation9], %s930
        // Predicated region
        $region45: #{tpu_custom_call.1} parent=27 // pred_check
          %p932 = pneg %p120
        $region46: #{tpu_custom_call.1} parent=27 // pred_check_branch
          %934 = sbr.rel (%p932) target = $region48
        $region47: #{tpu_custom_call.1} parent=27 // pred_region
          %s935 = smul.u32 32, %s30
          %s937 = ssub.s32 4096, 4096
          %938 = vsyncadd %s923, %s937
          %s939 = sadd.s32 %s31, %s935
          %s940 = smul.addr %s939, 128
          %s941 = scalar_lea.hbm %s2, %s940
          %s942 = sshll.u32 %s926, 4
          %s943 = int_to_ptr.vmem [resolvable:$true] %s942
          %948 = dma.vmem_to_hbm [thread:$0]  %s943, 4096, %s941, %s923, 128, 128, 8
        $region48: #{tpu_custom_call.1} parent=27 // pred_fallthru
          _
        // Predicated region
        $region49: #{tpu_custom_call.1} parent=27 // pred_check
          %p949 = pneg %p148
        $region50: #{tpu_custom_call.1} parent=27 // pred_check_branch
          %951 = sbr.rel (%p949) target = $region52
        $region51: #{tpu_custom_call.1} parent=27 // pred_region
          %s953 = ssub.s32 128, 128
          %954 = vsyncadd %s928, %s953
          %s955 = sadd.s32 %s31, %s30
          %s956 = smul.addr %s955, 128
          %s957 = scalar_lea.hbm %s3, %s956
          %s959 = sshll.u32 %s931, 4
          %s960 = int_to_ptr.vmem [resolvable:$true] %s959
          %962 = dma.vmem_to_hbm [thread:$0]  %s960, 128, %s957, %s928
        $region52: #{tpu_custom_call.1} parent=27 // pred_fallthru
          _
      $region28: #{tpu_custom_call.1} parent=5 // pred_fallthru
        _
      %p963 = scmp.le.s32.totalorder 2, %s20
      // Predicated region
      $region53: #{tpu_custom_call.1} parent=5 // pred_check
        %p964 = pneg %p963
      $region54: #{tpu_custom_call.1} parent=5 // pred_check_branch
        %966 = sbr.rel (%p964) target = $region56
      $region55: #{tpu_custom_call.1} parent=5 // pred_region
        %s967 = ssub.s32 %s20, 2
        // Predicated region
        $region57: #{tpu_custom_call.1} parent=55 // pred_check
          %p968 = pneg %p126
        $region58: #{tpu_custom_call.1} parent=55 // pred_check_branch
          %970 = sbr.rel (%p968) target = $region60
        $region59: #{tpu_custom_call.1} parent=55 // pred_region
          %s971 = sand.u32 %s111, 1
          %s972 = scalar_lea.sflag [#allocation5], %s971
          %s973 = sand.u32 %s111, 1
          %s974 = smul.addr %s973, 256
          %s975 = scalar_lea.vmem [#allocation8], %s974
          %976 = dma.done %s972, 4096
        $region60: #{tpu_custom_call.1} parent=55 // pred_fallthru
          _
        // Predicated region
        $region61: #{tpu_custom_call.1} parent=55 // pred_check
          %p977 = pneg %p154
        $region62: #{tpu_custom_call.1} parent=55 // pred_check_branch
          %979 = sbr.rel (%p977) target = $region64
        $region63: #{tpu_custom_call.1} parent=55 // pred_region
          %s980 = sand.u32 %s139, 1
          %s981 = scalar_lea.sflag [#allocation10], %s980
          %s982 = sand.u32 %s139, 1
          %s983 = smul.addr %s982, 8
          %s984 = scalar_lea.vmem [#allocation9], %s983
          %985 = dma.done %s981, 128
        $region64: #{tpu_custom_call.1} parent=55 // pred_fallthru
          _
      $region56: #{tpu_custom_call.1} parent=5 // pred_fallthru
        _
    $region6: #{tpu_custom_call.1} parent=1 // loop_footer
      %s24 = sadd.s32 1, %s20
    $region7: #{tpu_custom_call.1} parent=1 // loop_footer_branch
      %19 = sbr.rel target = $region3
    $region8: #{tpu_custom_call.1} parent=1 // loop_exit
      _
    %986 = vsyncpa [#allocation4], 1
    %s987 = scalar_lea.sflag [#allocation4], 1
    %988 = vsyncpa %s987, 1
    %989 = vsyncpa [#allocation7], 1
    %990 = vsyncpa [#allocation5], 1
    %s991 = scalar_lea.sflag [#allocation5], 1
    %992 = vsyncpa %s991, 1
    %993 = vsyncpa [#allocation10], 1
    %s994 = scalar_lea.sflag [#allocation10], 1
    %995 = vsyncpa %s994, 1

</llo_original>
